<compile_context>
chip_gen: v6e
topology: v6e:2x2x1
jax: 0.10.0
libtpu: 0.0.40
codegen_flags: <defaults>
</compile_context>

<pallas_src>
import jax
import jax.numpy as jnp
from jax import lax
from jax.experimental import pallas as pl
from jax.experimental.pallas import tpu as pltpu


def _l1_masked_kernel(thr_ref, x_ref, y_ref, out_ref):
    """One grid step: partial sum of masked |x - y| over a (Bblk, Fblk) block.

    thr_ref: (Bblk, 1) int32 in VMEM, per-row threshold = min(length, T) * D
             (0 for padded batch rows).
    x_ref, y_ref: (Bblk, Fblk) blocks of the flattened (B, T*D) inputs.
    out_ref: (1, 1) f32 SMEM block — this step's partial sum.
    """
    j = pl.program_id(1)
    Bblk, Fblk = x_ref.shape

    # Flat column index of every element in this block.
    col = j * Fblk + lax.broadcasted_iota(jnp.int32, (Bblk, Fblk), 1)
    mask = col < thr_ref[...]  # (Bblk, Fblk) via broadcast of (Bblk, 1)

    diff = x_ref[...].astype(jnp.float32) - y_ref[...].astype(jnp.float32)
    # where-masking keeps out-of-bounds boundary-block garbage (even NaN/inf)
    # out of the sum.
    out_ref[0, 0] = jnp.sum(jnp.where(mask, jnp.abs(diff), jnp.float32(0.0)))


def l1_loss_masked(inputs, target, length, *, block_bytes=2 * 1024 * 1024):
    """inputs, target: (B, T, D) float; length: (B,) int. Returns scalar f32.

    Matches L1LossMasked.forward: sum(|x*mask - y*mask|) / mask.sum()
    (computed as sum(mask * |x - y|) / mask.sum(); identical except for the
    pathological 0*inf case).
    """
    B, T, D = inputs.shape
    P = T * D

    # Free reshape to a lane-dense 2-D layout.
    x2 = inputs.reshape(B, P)
    y2 = target.reshape(B, P)

    length = length.astype(jnp.int32)
    eff_len = jnp.minimum(length, T)  # sequence_mask clamps at max_len

    # --- batch tiling -------------------------------------------------------
    Bblk = B if B <= 8 else 8
    nb = (B + Bblk - 1) // Bblk
    Bpad = nb * Bblk

    # --- flat-dim tiling: ~block_bytes per input per step -------------------
    itemsize = jnp.dtype(inputs.dtype).itemsize
    max_f = max(128, (block_bytes // (Bblk * itemsize)) // 128 * 128)
    if P <= max_f:
        Fblk, nf = P, 1
    else:
        Fblk = max_f
        nf = (P + Fblk - 1) // Fblk

    # Per-row mask threshold in flat coordinates; padded rows get 0 so any
    # out-of-bounds rows/cols of boundary blocks are masked out.
    thr = (eff_len * D).astype(jnp.int32)
    if Bpad > B:
        thr = jnp.pad(thr, (0, Bpad - B))
    thr = thr.reshape(Bpad, 1)

    partials = pl.pallas_call(
        _l1_masked_kernel,
        out_shape=jax.ShapeDtypeStruct((nb, nf), jnp.float32),
        grid=(nb, nf),
        in_specs=[
            pl.BlockSpec((Bblk, 1), lambda i, j: (i, 0)),
            pl.BlockSpec((Bblk, Fblk), lambda i, j: (i, j)),
            pl.BlockSpec((Bblk, Fblk), lambda i, j: (i, j)),
        ],
        out_specs=pl.BlockSpec((1, 1), lambda i, j: (i, j),
                               memory_space=pltpu.SMEM),
        compiler_params=pltpu.CompilerParams(
            dimension_semantics=("parallel", "parallel"),
            vmem_limit_bytes=32 * 1024 * 1024,
        ),
    )(thr, x2, y2)

    # mask.sum() == sum_b min(length_b, T) * D — tiny, compute in plain JAX.
    denom = jnp.sum(eff_len.astype(jnp.float32)) * jnp.float32(D)
    return jnp.sum(partials) / denom


def _reference(inputs, target, length):
    B, T, D = inputs.shape
    mask = (jnp.arange(T)[None, :] < length[:, None]).astype(jnp.float32)
    mask = jnp.broadcast_to(mask[:, :, None], (B, T, D))
    loss = jnp.sum(jnp.abs(inputs * mask - target * mask))
    return loss / jnp.sum(mask)


if __name__ == "__main__":
    key = jax.random.PRNGKey(0)

    # Case 1: small shapes matching the module's (batch, max_len, dim) layout.
    k1, k2 = jax.random.split(key)
    B, T, D = 2, 8, 32
    x = jax.random.normal(k1, (B, T, D), dtype=jnp.float32)
    y = jax.random.normal(k2, (B, T, D), dtype=jnp.float32)
    ln = jnp.array([5, 8], dtype=jnp.int32)
    out = l1_loss_masked(x, y, ln)
    jax.block_until_ready(out)
    ref = _reference(x, y, ln)
    assert jnp.allclose(out, ref, rtol=1e-5, atol=1e-6), (out, ref)

    # Case 2: batch > 8 exercises batch tiling + zero-masked padded rows.
    k3, k4 = jax.random.split(k2)
    B, T, D = 10, 20, 40
    x = jax.random.normal(k3, (B, T, D), dtype=jnp.float32)
    y = jax.random.normal(k4, (B, T, D), dtype=jnp.float32)
    ln = (jnp.arange(1, B + 1, dtype=jnp.int32) * 2)
    out = l1_loss_masked(x, y, ln)
    jax.block_until_ready(out)
    ref = _reference(x, y, ln)
    assert jnp.allclose(out, ref, rtol=1e-5, atol=1e-6), (out, ref)

    # Case 3: tiny block budget forces flat-dim tiling with a ragged tail.
    k5, k6 = jax.random.split(k4)
    B, T, D = 2, 9, 30
    x = jax.random.normal(k5, (B, T, D), dtype=jnp.float32)
    y = jax.random.normal(k6, (B, T, D), dtype=jnp.float32)
    ln = jnp.array([4, 9], dtype=jnp.int32)
    out = l1_loss_masked(x, y, ln, block_bytes=1024)
    jax.block_until_ready(out)
    ref = _reference(x, y, ln)
    assert jnp.allclose(out, ref, rtol=1e-5, atol=1e-6), (out, ref)

    print("KERNEL_OK")
</pallas_src>

<mosaic_0001>
module attributes {stable_mosaic.version = 11 : i64} {
  func.func @_l1_masked_kernel(%arg0: i32, %arg1: i32, %arg2: memref<2x1xi32, #tpu.memory_space<vmem>>, %arg3: memref<2x256xf32, #tpu.memory_space<vmem>>, %arg4: memref<2x256xf32, #tpu.memory_space<vmem>>, %arg5: memref<1x1xf32, #tpu.memory_space<smem>>) attributes {dimension_semantics = [#tpu.dimension_semantics<parallel>, #tpu.dimension_semantics<parallel>], iteration_bounds = array<i64: 1, 1>, scalar_prefetch = 0 : i64, scratch_operands = 0 : i64, tpu.core_type = #tpu.core_type<tc>, window_params = [{transform_indices = @transform_0, window_bounds = array<i64: 2, 1>}, {transform_indices = @transform_1, window_bounds = array<i64: 2, 256>}, {transform_indices = @transform_2, window_bounds = array<i64: 2, 256>}, {transform_indices = @transform_3, window_bounds = array<i64: 1, 1>}]} {
    %c256_i32 = arith.constant 256 : i32
    %0 = arith.muli %arg1, %c256_i32 : i32
    %1 = tpu.iota {dimensions = array<i32: 1>} : vector<2x256xi32>
    %2 = vector.broadcast %0 : i32 to vector<2x256xi32>
    %3 = arith.addi %2, %1 : vector<2x256xi32>
    %c0 = arith.constant 0 : index
    %c0_0 = arith.constant 0 : index
    %4 = vector.load %arg2[%c0, %c0_0] : memref<2x1xi32, #tpu.memory_space<vmem>>, vector<2x1xi32>
    %5 = vector.broadcast %4 : vector<2x1xi32> to vector<2x256xi32>
    %6 = arith.cmpi slt, %3, %5 : vector<2x256xi32>
    %c0_1 = arith.constant 0 : index
    %c0_2 = arith.constant 0 : index
    %7 = vector.load %arg3[%c0_1, %c0_2] : memref<2x256xf32, #tpu.memory_space<vmem>>, vector<2x256xf32>
    %c0_3 = arith.constant 0 : index
    %c0_4 = arith.constant 0 : index
    %8 = vector.load %arg4[%c0_3, %c0_4] : memref<2x256xf32, #tpu.memory_space<vmem>>, vector<2x256xf32>
    %9 = arith.subf %7, %8 : vector<2x256xf32>
    %10 = math.absf %9 : vector<2x256xf32>
    %cst = arith.constant 0.000000e+00 : f32
    %11 = vector.broadcast %cst : f32 to vector<2x256xf32>
    %12 = arith.select %6, %10, %11 : vector<2x256xi1>, vector<2x256xf32>
    %13 = vector.shape_cast %12 : vector<2x256xf32> to vector<1x2x256xf32>
    %cst_5 = arith.constant dense<0.000000e+00> : vector<1xf32>
    %14 = vector.multi_reduction <add>, %13, %cst_5 [1, 2] : vector<1x2x256xf32> to vector<1xf32>
    %15 = vector.shape_cast %14 : vector<1xf32> to vector<1x1x1xf32>
    %16 = vector.extract %15[0, 0, 0] : f32 from vector<1x1x1xf32>
    %c0_6 = arith.constant 0 : index
    %c0_7 = arith.constant 0 : index
    %17 = memref.load %arg5[%c0_6, %c0_7] : memref<1x1xf32, #tpu.memory_space<smem>>
    memref.store %16, %arg5[%c0_6, %c0_7] : memref<1x1xf32, #tpu.memory_space<smem>>
    return
  }
  func.func @transform_0(%arg0: i32, %arg1: i32) -> (i32, i32) {
    %c0_i32 = arith.constant 0 : i32
    %c0_i32_0 = arith.constant 0 : i32
    return %arg0, %c0_i32 : i32, i32
  }
  func.func @transform_1(%arg0: i32, %arg1: i32) -> (i32, i32) {
    %c0_i32 = arith.constant 0 : i32
    return %arg0, %arg1 : i32, i32
  }
  func.func @transform_2(%arg0: i32, %arg1: i32) -> (i32, i32) {
    %c0_i32 = arith.constant 0 : i32
    return %arg0, %arg1 : i32, i32
  }
  func.func @transform_3(%arg0: i32, %arg1: i32) -> (i32, i32) {
    %c0_i32 = arith.constant 0 : i32
    return %arg0, %arg1 : i32, i32
  }
}

</mosaic_0001>

<llo_original>
// kernel: tpu_custom_call.1
$region0: #{tpu_custom_call.1}
  #allocation0 [shape = 'u32[]', space=smem, size = 0x4, offset = 0x4, fixed_abs, tag = 'smem constant byte address 0x4 - core index']
  #allocation1 [shape = 'u32[144,128]{1,0:T(1,128)}', space=vmem, size = 0x12000, scoped, tag = 'internal scratch']
  %s0 = inlined_call_operand.vmem [shape: s32[2,1], index: 0, kind: input, shape index: {}]
  %s1 = inlined_call_operand.vmem [shape: f32[2,256], index: 1, kind: input, shape index: {}]
  %s2 = inlined_call_operand.hbm [shape: f32[2,256], index: 2, kind: input, shape index: {}]
  %s3 = inlined_call_operand.hbm [shape: f32[1,1], index: 3, kind: output, shape index: {}]
  %s4 = sld [smem:[#allocation0]]
  $region26: #{tpu_custom_call.1} parent=0
    _
  %s6 = ssub.s32 1, %s4
  %s7 = scalar_select 0, %s6, %s4
  $region1: #{tpu_custom_call.1} parent=0
    #allocation2 [shape = 'u8[2048]{0}', space=vmem, size = 0x800, scoped, tag = 'input window, operand 2, single buffered']
    #allocation3 [shape = 's32[1]{0}', space=sflag, size = 0x4, scoped, tag = 'scoped memory for tpu_custom_call.1']
    #allocation4 [shape = 's32[1]{0}', space=sflag, size = 0x4, scoped, tag = 'scoped memory for tpu_custom_call.1']
    #allocation5 [shape = 'u8[512]{0}', space=smem, size = 0x200, scoped, tag = 'output window, operand 0, single buffered']
    %8 = vsyncpa [#allocation3], 0
    %9 = vsyncpa [#allocation4], 0
    // Predicated region
    $region2: #{tpu_custom_call.1} parent=1 // pred_check
      _
    $region3: #{tpu_custom_call.1} parent=1 // pred_check_branch
      %11 = sbr.rel (0) target = $region5
    $region4: #{tpu_custom_call.1} parent=1 // pred_region
      _
    $region5: #{tpu_custom_call.1} parent=1 // pred_fallthru
      _
    // Predicated region
    $region6: #{tpu_custom_call.1} parent=1 // pred_check
      _
    $region7: #{tpu_custom_call.1} parent=1 // pred_check_branch
      %13 = sbr.rel (0) target = $region9
    $region8: #{tpu_custom_call.1} parent=1 // pred_region
      _
    $region9: #{tpu_custom_call.1} parent=1 // pred_fallthru
      _
    // Predicated region
    $region10: #{tpu_custom_call.1} parent=1 // pred_check
      _
    $region11: #{tpu_custom_call.1} parent=1 // pred_check_branch
      %15 = sbr.rel (0) target = $region13
    $region12: #{tpu_custom_call.1} parent=1 // pred_region
      %s17 = ssub.s32 64, 64
      %18 = vsyncadd [#allocation3], %s17
      %s20 = sshll.u32 [#allocation2], 4
      %s21 = int_to_ptr.vmem [resolvable:$true] %s20
      %23 = dma.hbm_to_vmem [thread:$0]  %s2, 64, %s21, [#allocation3]
    $region13: #{tpu_custom_call.1} parent=1 // pred_fallthru
      _
    // Predicated region
    $region14: #{tpu_custom_call.1} parent=1 // pred_check
      _
    $region15: #{tpu_custom_call.1} parent=1 // pred_check_branch
      %25 = sbr.rel (0) target = $region17
    $region16: #{tpu_custom_call.1} parent=1 // pred_region
      %26 = dma.done [#allocation3], 64
    $region17: #{tpu_custom_call.1} parent=1 // pred_fallthru
      _
    %s27 = smul.u32 0, 256
    %v28 = vlaneseq
    %v29 = vand.u32 %v28, 127
    %v30 = vadd.s32 %v29, 128
    %v31 = vstv %s27
    %v32 = vadd.s32 %v31, %v29
    %v33 = vadd.s32 %v31, %v30
    %v34 = vld [vmem:[%s0] sm:$0x3]
    %35 = vset.pattern.permute.xlu0 0
    %36 = vperm.xlu0 %35, %v34
    %v37 = vpop.permute.xlu0 %36
    %vm38 = vcmp.lt.s32.totalorder %v32, %v37
    %vm39 = vcmp.lt.s32.totalorder %v33, %v37
    %v40 = vld [vmem:[%s1] sm:$0xf]
    %v41 = vld [vmem:[#allocation2] sm:$0xf]
    %v42 = vsub.f32 %v40, %v41
    %v43 = vand.u32 2147483647, %v42
    %v46 = vunpack.c.l.s4 1983009808
    %v47 = vunpack.c.0.s8 %v46
    %v48 = vlaneseq
    %v49 = vshrl.u32 %v48, 7
    %v50 = vsub.s32 %v47, %v49
    %v51 = vrot.slane %v43, %v50
    %v52 = vcombine.high %v51, %v51
    %v55 = vsel %vm38, %v51, 0.0
    %v56 = vsel %vm39, %v52, 0.0
    %vm57 = vcmask 1041408
    %v58 = vsel %vm57, %v55, 0.0
    %v59 = vsel %vm57, %v56, 0.0
    %v60 = vadd.f32 %v58, %v59
    %61 = vadd.xlane.f32.xlu0 %v60
    %v62 = vpop.xlane.xlu0 %61
    %v63 = vrot.slane %v62, 4
    %v64 = vadd.f32 %v62, %v63
    %v65 = vrot.slane %v64, 2
    %v66 = vadd.f32 %v64, %v65
    %v67 = vrot.slane %v66, 1
    %v68 = vadd.f32 %v66, %v67
    %s69 = vtos %v68
    %s70 = scalar_lea.smem [#allocation5], 0
    %71 = sst [smem:[%s70]] %s69
    // Predicated region
    $region18: #{tpu_custom_call.1} parent=1 // pred_check
      _
    $region19: #{tpu_custom_call.1} parent=1 // pred_check_branch
      %73 = sbr.rel (0) target = $region21
    $region20: #{tpu_custom_call.1} parent=1 // pred_region
      %s75 = ssub.s32 16, 16
      %76 = vsyncadd [#allocation4], %s75
      %79 = dma.smem_to_hbm [#allocation5], 16, %s3, [#allocation4]
    $region21: #{tpu_custom_call.1} parent=1 // pred_fallthru
      _
    // Predicated region
    $region22: #{tpu_custom_call.1} parent=1 // pred_check
      _
    $region23: #{tpu_custom_call.1} parent=1 // pred_check_branch
      %81 = sbr.rel (0) target = $region25
    $region24: #{tpu_custom_call.1} parent=1 // pred_region
      %82 = dma.done [#allocation4], 16
    $region25: #{tpu_custom_call.1} parent=1 // pred_fallthru
      _
    %83 = sfence
    %84 = vsyncpa [#allocation3], 1
    %85 = vsyncpa [#allocation4], 1

</llo_original>
